<compile_context>
chip_gen: v7x
topology: tpu7x:2x2x1
jax: 0.10.0
libtpu: 0.0.40
codegen_flags: <defaults>
</compile_context>

<pallas_src>
import functools

import jax
import jax.numpy as jnp
from jax.experimental import pallas as pl
from jax.experimental.pallas import tpu as pltpu

LANE = 128
MAX_TILE = 1024                       # 1024-tiles: ~86% of HBM roofline, few epilogues
FUSED_VMEM_BUDGET = 12 * 1024 * 1024  # fuse both layers when everything fits in VMEM


def _round_up(v, m):
    return ((v + m - 1) // m) * m


def _pad2d(a, rows, cols):
    return jnp.pad(a, ((0, rows - a.shape[0]), (0, cols - a.shape[1])))


# --------------------- fused small-N kernel (single launch) ------------------ #

def _make_fused_kernel(has_mask: bool):
    """Both GCNConv layers in one kernel; every operand VMEM-resident."""

    def kernel(adj_ref, x_ref, w1_ref, b1_ref, w2_ref, b2_ref, *rest):
        if has_mask:
            mask_ref, out_ref = rest
        else:
            (out_ref,) = rest

        adj = adj_ref[...]
        # Layer 1: relu(A @ (X W1) + b1).  XW is computed once; the cast to the
        # adjacency dtype is a deliberate trade-off so the O(N^2) aggregation
        # runs on the bf16 MXU when adj is bf16.
        xw1 = jnp.dot(x_ref[...], w1_ref[...], preferred_element_type=jnp.float32)
        h = jnp.dot(adj, xw1.astype(adj.dtype), preferred_element_type=jnp.float32)
        h = jnp.maximum(h + b1_ref[...], 0.0)
        if has_mask:
            h = h * mask_ref[...].astype(jnp.float32)   # pre-scaled inverted dropout
        # Layer 2: A @ (H W2) + b2
        xw2 = jnp.dot(h, w2_ref[...], preferred_element_type=jnp.float32)
        out = jnp.dot(adj, xw2.astype(adj.dtype), preferred_element_type=jnp.float32)
        out_ref[...] = (out + b2_ref[...]).astype(out_ref.dtype)

    return kernel


def _gcn_fused(adj, x, w1, b1, w2, b2, mask):
    np_, in_p = x.shape
    hid_p = w1.shape[1]
    out_p = w2.shape[1]

    args = [adj, x, w1, b1, w2, b2]
    if mask is not None:
        args.append(mask)
    in_specs = [pl.BlockSpec(a.shape, lambda i: (0, 0)) for a in args]

    flops = (2 * np_ * in_p * hid_p + 2 * np_ * np_ * hid_p
             + 2 * np_ * hid_p * out_p + 2 * np_ * np_ * out_p)
    bytes_accessed = (sum(int(a.size) * a.dtype.itemsize for a in args)
                      + np_ * out_p * 4)

    return pl.pallas_call(
        _make_fused_kernel(mask is not None),
        out_shape=jax.ShapeDtypeStruct((np_, out_p), jnp.float32),
        grid_spec=pltpu.PrefetchScalarGridSpec(
            num_scalar_prefetch=0,
            grid=(1,),
            in_specs=in_specs,
            out_specs=pl.BlockSpec((np_, out_p), lambda i: (0, 0)),
        ),
        compiler_params=pltpu.CompilerParams(
            dimension_semantics=("arbitrary",),
        ),
        cost_estimate=pl.CostEstimate(
            flops=flops, transcendentals=0, bytes_accessed=bytes_accessed),
    )(*args)


# ------------------- tiled aggregation kernel (large-N path) ----------------- #

def _make_agg_kernel(apply_relu: bool, has_mask: bool, use_acc: bool):
    """out[i] = act( sum_k adj[i,k] @ xw[k] + b )  with optional ReLU / mask.

    When the output is f32 we accumulate directly into out_ref (resident across
    the k axis); a scratch f32 accumulator is used only for bf16 outputs."""

    def kernel(adj_ref, xw_ref, b_ref, *rest):
        rest = list(rest)
        mask_ref = rest.pop(0) if has_mask else None
        out_ref = rest.pop(0)
        acc_ref = rest.pop(0) if use_acc else out_ref

        k = pl.program_id(1)

        @pl.when(k == 0)
        def _():
            acc_ref[...] = jnp.zeros_like(acc_ref)

        # Pure adjacency-stream matmul: adj and xw share a dtype, no in-loop cast.
        acc_ref[...] += jnp.dot(adj_ref[...], xw_ref[...],
                                preferred_element_type=jnp.float32)

        @pl.when(k == pl.num_programs(1) - 1)
        def _():
            h = acc_ref[...].astype(jnp.float32) + b_ref[...]
            if apply_relu:
                h = jnp.maximum(h, 0.0)
            if has_mask:
                h = h * mask_ref[...].astype(jnp.float32)
            out_ref[...] = h.astype(out_ref.dtype)

    return kernel


def _gcn_agg(adj, xw, b, *, tm, tk, relu, mask, out_dtype):
    """adj: (Np,Np) [f32|bf16]; xw: (Np,Fout_p) same dtype; b: (1,Fout_p) f32."""
    np_ = adj.shape[0]
    out_p = xw.shape[1]
    grid = (np_ // tm, np_ // tk)
    use_acc = out_dtype != jnp.float32
    out_item = 2 if use_acc else 4

    in_specs = [
        pl.BlockSpec((tm, tk), lambda i, k: (i, k)),      # adjacency tile (streamed)
        pl.BlockSpec((tk, out_p), lambda i, k: (k, 0)),   # precomputed XW tile
        pl.BlockSpec((1, out_p), lambda i, k: (0, 0)),    # bias (resident)
    ]
    args = [adj, xw, b]
    if mask is not None:
        in_specs.append(pl.BlockSpec((tm, out_p), lambda i, k: (i, 0)))
        args.append(mask)

    scratch = [pltpu.VMEM((tm, out_p), jnp.float32)] if use_acc else []

    # XW was hoisted out of the loop: FLOPs here are just the aggregation matmul.
    flops = 2 * np_ * np_ * out_p
    bytes_accessed = (int(adj.size) * adj.dtype.itemsize
                      + int(xw.size) * xw.dtype.itemsize * grid[0]
                      + int(b.size) * b.dtype.itemsize
                      + np_ * out_p * out_item
                      + (int(mask.size) * mask.dtype.itemsize if mask is not None else 0))

    # Double-buffered VMEM footprint for this call; never request below the
    # 32 MiB default, cap at 48 MiB (headroom on v7x's 64 MiB physical VMEM).
    vmem_bytes = 2 * (tm * tk * adj.dtype.itemsize
                      + tk * out_p * xw.dtype.itemsize
                      + out_p * b.dtype.itemsize
                      + (tm * out_p * mask.dtype.itemsize if mask is not None else 0)
                      + tm * out_p * out_item)
    if use_acc:
        vmem_bytes += tm * out_p * 4
    vmem_limit = min(48 << 20, max(32 << 20, 2 * vmem_bytes))

    return pl.pallas_call(
        _make_agg_kernel(relu, mask is not None, use_acc),
        out_shape=jax.ShapeDtypeStruct((np_, out_p), out_dtype),
        grid_spec=pltpu.PrefetchScalarGridSpec(
            num_scalar_prefetch=0,
            grid=grid,
            in_specs=in_specs,
            out_specs=pl.BlockSpec((tm, out_p), lambda i, k: (i, 0)),
            scratch_shapes=scratch,
        ),
        compiler_params=pltpu.CompilerParams(
            dimension_semantics=("parallel", "arbitrary"),
            vmem_limit_bytes=vmem_limit,
        ),
        cost_estimate=pl.CostEstimate(
            flops=flops, transcendentals=0, bytes_accessed=bytes_accessed),
    )(*args)


# ----------------------------- forward wrapper ------------------------------ #

@functools.partial(jax.jit,
                   static_argnames=("training", "use_bf16_adj", "force_tiled"))
def gcn_forward(adj, x, w1, b1, w2, b2, dropout_key=None, *,
                training=False, use_bf16_adj=False, force_tiled=False):
    """adj: (N,N) normalized adjacency; x: (N,Fin); returns (N,Fout) f32."""
    n, in_c = x.shape
    hid_c = w1.shape[1]
    out_c = w2.shape[1]

    in_p = _round_up(in_c, LANE)
    hid_p = _round_up(hid_c, LANE)
    out_p = _round_up(out_c, LANE)
    adj_dtype = jnp.bfloat16 if use_bf16_adj else jnp.float32
    adj_item = 2 if use_bf16_adj else 4

    # ---- path selection: fused single-launch vs tiled adjacency stream -------
    np_small = _round_up(n, LANE)
    fused_bytes = (2 * np_small * np_small * adj_item                 # adj (x2 buf)
                   + np_small * (in_p + 2 * hid_p + 2 * out_p) * 4    # x, H, XW, out
                   + (in_p * hid_p + hid_p * out_p) * 4)              # weights
    use_fused = (not force_tiled) and fused_bytes <= FUSED_VMEM_BUDGET

    if use_fused:
        np_ = np_small
    else:
        tm = tk = min(MAX_TILE, _round_up(n, LANE))
        np_ = _round_up(n, tm)
        if np_ // tm < 2 and tm > LANE:   # v7x: keep >=2 row tiles for the 2 TCs
            tm = max(LANE, tm // 2)

    adj_p = _pad2d(adj.astype(jnp.float32), np_, np_).astype(adj_dtype)
    x_p = _pad2d(x.astype(jnp.float32), np_, in_p)
    w1_p = _pad2d(w1, in_p, hid_p)
    b1_p = _pad2d(b1.reshape(1, -1), 1, hid_p)
    w2_p = _pad2d(w2, hid_p, out_p)
    b2_p = _pad2d(b2.reshape(1, -1), 1, out_p)

    if training:
        # Inverted dropout (p=0.5), pre-scaled by 1/keep_prob; generated only for
        # the real (n, hid_c) region, padded with zeros, and stored bf16 to halve
        # the mask DMA.  Deterministic per dropout_key; not torch's RNG stream.
        keep = jax.random.bernoulli(dropout_key, 0.5, (n, hid_c))
        mask = _pad2d((keep.astype(jnp.float32) * 2.0), np_, hid_p).astype(jnp.bfloat16)
    else:
        mask = None   # eval path: no mask input / DMA at all

    if use_fused:
        y = _gcn_fused(adj_p, x_p, w1_p, b1_p, w2_p, b2_p, mask)
        return y[:n, :out_c]

    # Tiled path: hoist the feature transform out of the aggregation loop.
    # XW is computed once (plain XLA matmul, f32 accumulate) and pre-cast to the
    # adjacency dtype so the Pallas inner loop is cast-free.
    h_dtype = adj_dtype    # layer-1 intermediate H stored bf16 on the bf16 path
    xw1 = jnp.dot(x_p, w1_p, preferred_element_type=jnp.float32).astype(adj_dtype)
    h = _gcn_agg(adj_p, xw1, b1_p, tm=tm, tk=tk, relu=True, mask=mask,
                 out_dtype=h_dtype)
    xw2 = jnp.dot(h.astype(jnp.float32), w2_p,
                  preferred_element_type=jnp.float32).astype(adj_dtype)
    y = _gcn_agg(adj_p, xw2, b2_p, tm=tm, tk=tk, relu=False, mask=None,
                 out_dtype=jnp.float32)
    return y[:n, :out_c]


# ----------------------------- JAX glue ------------------------------------ #

def build_normalized_adjacency(edge_index, num_nodes):
    """Dense A_hat = D^-1/2 (A + I) D^-1/2, matching PyG GCNConv's gcn_norm
    (add_self_loops=True, symmetric normalization, flow source->target).
    Duplicate edges accumulate (like PyG's scatter-add); explicit self-loops in
    edge_index are dropped before adding I so every self-loop weight is exactly 1.
    Callers must pass both directions for an undirected graph."""
    src, dst = edge_index[0], edge_index[1]
    w = jnp.where(src == dst, 0.0, 1.0)
    a = jnp.zeros((num_nodes, num_nodes), jnp.float32)
    a = a.at[dst, src].add(w)
    a = a + jnp.eye(num_nodes, dtype=jnp.float32)
    deg = a.sum(axis=1)
    dinv = jnp.where(deg > 0, 1.0 / jnp.sqrt(deg), 0.0)
    return dinv[:, None] * a * dinv[None, :]


def init_gcn_params(key, in_channels, hidden_channels, out_channels):
    """Glorot-uniform weights, zero biases (matches GCNConv reset_parameters)."""
    k1, k2 = jax.random.split(key)

    def glorot(k, fan_in, fan_out):
        lim = jnp.sqrt(6.0 / (fan_in + fan_out))
        return jax.random.uniform(k, (fan_in, fan_out), jnp.float32, -lim, lim)

    w1 = glorot(k1, in_channels, hidden_channels)
    b1 = jnp.zeros((hidden_channels,), jnp.float32)
    w2 = glorot(k2, hidden_channels, out_channels)
    b2 = jnp.zeros((out_channels,), jnp.float32)
    return w1, b1, w2, b2


def gcn_reference(adj, x, w1, b1, w2, b2):
    """Pure-JAX eval-mode reference for correctness checking."""
    h = jax.nn.relu(adj @ (x @ w1) + b1[None, :])
    return adj @ (h @ w2) + b2[None, :]


# ----------------------------- main ----------------------------------------- #

if __name__ == "__main__":
    N, IN_C, HID_C, OUT_C, N_EDGES = 64, 16, 32, 8, 128

    key = jax.random.PRNGKey(0)
    k_x, k_src, k_dst, k_params, k_drop = jax.random.split(key, 5)

    # Node features (stand-in for [embedding|mutation_pca|depth|date|is_hyp]).
    x = jax.random.normal(k_x, (N, IN_C), jnp.float32)

    # Random edge_index (2, E), same role as the filtered/reindexed edges.
    src = jax.random.randint(k_src, (N_EDGES,), 0, N, jnp.int32)
    dst = jax.random.randint(k_dst, (N_EDGES,), 0, N, jnp.int32)
    edge_index = jnp.stack([src, dst], axis=0)

    # Deterministic parameters (synthetic; no checkpoint load).
    w1, b1, w2, b2 = init_gcn_params(k_params, IN_C, HID_C, OUT_C)

    # Sparse -> dense normalized adjacency (glue, plain JAX).
    adj = build_normalized_adjacency(edge_index, N)
    ref = gcn_reference(adj, x, w1, b1, w2, b2)

    # 1) Fused single-launch path (small-N regime), full f32: strict check.
    out = jax.block_until_ready(gcn_forward(adj, x, w1, b1, w2, b2, training=False))
    assert out.shape == (N, OUT_C)
    assert jnp.allclose(out, ref, atol=1e-4, rtol=1e-4), "fused f32 mismatch"

    # 2) Fused path with bf16 adjacency/aggregation (MXU fast path): loose tol.
    out_bf16 = jax.block_until_ready(
        gcn_forward(adj, x, w1, b1, w2, b2, training=False, use_bf16_adj=True))
    assert jnp.allclose(out_bf16, ref, atol=1e-1, rtol=1e-1), "fused bf16 diverged"

    # 3) Tiled (large-N) path forced at small size, f32: strict check.
    out_tiled = jax.block_until_ready(
        gcn_forward(adj, x, w1, b1, w2, b2, training=False, force_tiled=True))
    assert jnp.allclose(out_tiled, ref, atol=1e-4, rtol=1e-4), "tiled f32 mismatch"

    # 4) Tiled path, bf16 adjacency + bf16 intermediate H: loose tolerance.
    out_tiled_bf16 = jax.block_until_ready(
        gcn_forward(adj, x, w1, b1, w2, b2, training=False, use_bf16_adj=True,
                    force_tiled=True))
    assert jnp.allclose(out_tiled_bf16, ref, atol=1e-1, rtol=1e-1), "tiled bf16 diverged"

    # 5) Training path (inverted dropout p=0.5 via wrapper-generated bf16 mask),
    #    fused and tiled variants, just shape/compile checks.
    out_train = jax.block_until_ready(
        gcn_forward(adj, x, w1, b1, w2, b2, dropout_key=k_drop,
                    training=True, use_bf16_adj=True))
    assert out_train.shape == (N, OUT_C)
    out_train_tiled = jax.block_until_ready(
        gcn_forward(adj, x, w1, b1, w2, b2, dropout_key=k_drop,
                    training=True, use_bf16_adj=True, force_tiled=True))
    assert out_train_tiled.shape == (N, OUT_C)

    print("KERNEL_OK")
</pallas_src>

<mosaic_0001>
module attributes {stable_mosaic.version = 11 : i64} {
  func.func @kernel(%arg0: i32, %arg1: memref<128x128xf32, #tpu.memory_space<vmem>>, %arg2: memref<128x128xf32, #tpu.memory_space<vmem>>, %arg3: memref<128x128xf32, #tpu.memory_space<vmem>>, %arg4: memref<1x128xf32, #tpu.memory_space<vmem>>, %arg5: memref<128x128xf32, #tpu.memory_space<vmem>>, %arg6: memref<1x128xf32, #tpu.memory_space<vmem>>, %arg7: memref<128x128xf32, #tpu.memory_space<vmem>>) attributes {dimension_semantics = [#tpu.dimension_semantics<arbitrary>], iteration_bounds = array<i64: 1>, scalar_prefetch = 0 : i64, scratch_operands = 0 : i64, tpu.core_type = #tpu.core_type<tc>, window_params = [{pipeline_mode = #tpu.pipeline_mode<synchronous>, transform_indices = @transform_0, window_bounds = array<i64: 128, 128>}, {pipeline_mode = #tpu.pipeline_mode<synchronous>, transform_indices = @transform_1, window_bounds = array<i64: 128, 128>}, {pipeline_mode = #tpu.pipeline_mode<synchronous>, transform_indices = @transform_2, window_bounds = array<i64: 128, 128>}, {pipeline_mode = #tpu.pipeline_mode<synchronous>, transform_indices = @transform_3, window_bounds = array<i64: 1, 128>}, {pipeline_mode = #tpu.pipeline_mode<synchronous>, transform_indices = @transform_4, window_bounds = array<i64: 128, 128>}, {pipeline_mode = #tpu.pipeline_mode<synchronous>, transform_indices = @transform_5, window_bounds = array<i64: 1, 128>}, {pipeline_mode = #tpu.pipeline_mode<synchronous>, transform_indices = @transform_6, window_bounds = array<i64: 128, 128>}]} {
    %c0 = arith.constant 0 : index
    %c0_0 = arith.constant 0 : index
    %0 = vector.load %arg1[%c0, %c0_0] : memref<128x128xf32, #tpu.memory_space<vmem>>, vector<128x128xf32>
    %c0_1 = arith.constant 0 : index
    %c0_2 = arith.constant 0 : index
    %1 = vector.load %arg2[%c0_1, %c0_2] : memref<128x128xf32, #tpu.memory_space<vmem>>, vector<128x128xf32>
    %c0_3 = arith.constant 0 : index
    %c0_4 = arith.constant 0 : index
    %2 = vector.load %arg3[%c0_3, %c0_4] : memref<128x128xf32, #tpu.memory_space<vmem>>, vector<128x128xf32>
    %cst = arith.constant dense<0.000000e+00> : vector<128x128xf32>
    %3 = tpu.matmul %1, %2, %cst {dimension_numbers = #tpu.dot_dimension_numbers<[1], [0], [0], [1], [0, 0, 1, 1], [], []>} : vector<128x128xf32>, vector<128x128xf32>, vector<128x128xf32> -> vector<128x128xf32>
    %cst_5 = arith.constant dense<0.000000e+00> : vector<128x128xf32>
    %4 = tpu.matmul %0, %3, %cst_5 {dimension_numbers = #tpu.dot_dimension_numbers<[1], [0], [0], [1], [0, 0, 1, 1], [], []>} : vector<128x128xf32>, vector<128x128xf32>, vector<128x128xf32> -> vector<128x128xf32>
    %c0_6 = arith.constant 0 : index
    %c0_7 = arith.constant 0 : index
    %5 = vector.load %arg4[%c0_6, %c0_7] : memref<1x128xf32, #tpu.memory_space<vmem>>, vector<1x128xf32>
    %6 = vector.broadcast %5 : vector<1x128xf32> to vector<128x128xf32>
    %7 = arith.addf %4, %6 : vector<128x128xf32>
    %cst_8 = arith.constant 0.000000e+00 : f32
    %8 = vector.broadcast %cst_8 : f32 to vector<128x128xf32>
    %9 = arith.maximumf %7, %8 : vector<128x128xf32>
    %c0_9 = arith.constant 0 : index
    %c0_10 = arith.constant 0 : index
    %10 = vector.load %arg5[%c0_9, %c0_10] : memref<128x128xf32, #tpu.memory_space<vmem>>, vector<128x128xf32>
    %cst_11 = arith.constant dense<0.000000e+00> : vector<128x128xf32>
    %11 = tpu.matmul %9, %10, %cst_11 {dimension_numbers = #tpu.dot_dimension_numbers<[1], [0], [0], [1], [0, 0, 1, 1], [], []>} : vector<128x128xf32>, vector<128x128xf32>, vector<128x128xf32> -> vector<128x128xf32>
    %cst_12 = arith.constant dense<0.000000e+00> : vector<128x128xf32>
    %12 = tpu.matmul %0, %11, %cst_12 {dimension_numbers = #tpu.dot_dimension_numbers<[1], [0], [0], [1], [0, 0, 1, 1], [], []>} : vector<128x128xf32>, vector<128x128xf32>, vector<128x128xf32> -> vector<128x128xf32>
    %c0_13 = arith.constant 0 : index
    %c0_14 = arith.constant 0 : index
    %13 = vector.load %arg6[%c0_13, %c0_14] : memref<1x128xf32, #tpu.memory_space<vmem>>, vector<1x128xf32>
    %14 = vector.broadcast %13 : vector<1x128xf32> to vector<128x128xf32>
    %15 = arith.addf %12, %14 : vector<128x128xf32>
    %c0_15 = arith.constant 0 : index
    %c0_16 = arith.constant 0 : index
    %16 = vector.load %arg7[%c0_15, %c0_16] : memref<128x128xf32, #tpu.memory_space<vmem>>, vector<128x128xf32>
    tpu.vector_store %arg7[%c0_15, %c0_16], %15 {strides = array<i32>} : memref<128x128xf32, #tpu.memory_space<vmem>>, vector<128x128xf32>,
    return
  }
  func.func @transform_0(%arg0: i32) -> (i32, i32) {
    %c0_i32 = arith.constant 0 : i32
    %c0_i32_0 = arith.constant 0 : i32
    %c0_i32_1 = arith.constant 0 : i32
    return %c0_i32, %c0_i32_0 : i32, i32
  }
  func.func @transform_1(%arg0: i32) -> (i32, i32) {
    %c0_i32 = arith.constant 0 : i32
    %c0_i32_0 = arith.constant 0 : i32
    %c0_i32_1 = arith.constant 0 : i32
    return %c0_i32, %c0_i32_0 : i32, i32
  }
  func.func @transform_2(%arg0: i32) -> (i32, i32) {
    %c0_i32 = arith.constant 0 : i32
    %c0_i32_0 = arith.constant 0 : i32
    %c0_i32_1 = arith.constant 0 : i32
    return %c0_i32, %c0_i32_0 : i32, i32
  }
  func.func @transform_3(%arg0: i32) -> (i32, i32) {
    %c0_i32 = arith.constant 0 : i32
    %c0_i32_0 = arith.constant 0 : i32
    %c0_i32_1 = arith.constant 0 : i32
    return %c0_i32, %c0_i32_0 : i32, i32
  }
  func.func @transform_4(%arg0: i32) -> (i32, i32) {
    %c0_i32 = arith.constant 0 : i32
    %c0_i32_0 = arith.constant 0 : i32
    %c0_i32_1 = arith.constant 0 : i32
    return %c0_i32, %c0_i32_0 : i32, i32
  }
  func.func @transform_5(%arg0: i32) -> (i32, i32) {
    %c0_i32 = arith.constant 0 : i32
    %c0_i32_0 = arith.constant 0 : i32
    %c0_i32_1 = arith.constant 0 : i32
    return %c0_i32, %c0_i32_0 : i32, i32
  }
  func.func @transform_6(%arg0: i32) -> (i32, i32) {
    %c0_i32 = arith.constant 0 : i32
    %c0_i32_0 = arith.constant 0 : i32
    %c0_i32_1 = arith.constant 0 : i32
    return %c0_i32, %c0_i32_0 : i32, i32
  }
}

</mosaic_0001>

<llo_original>
// kernel: gcn_forward.1
$region0: #{gcn_forward.1}
  #allocation0 [shape = 'u32[]', space=smem, size = 0x4, offset = 0x4, fixed_abs, tag = 'smem constant byte address 0x4 - core index']
  #allocation1 [shape = 'u32[144,128]{1,0:T(1,128)}', space=vmem, size = 0x12000, scoped, tag = 'internal scratch']
  %s0 = inlined_call_operand.vmem [shape: f32[128,128], index: 0, kind: input, shape index: {}]
  %s1 = inlined_call_operand.vmem [shape: f32[128,128], index: 1, kind: input, shape index: {}]
  %s2 = inlined_call_operand.vmem [shape: f32[128,128], index: 2, kind: input, shape index: {}]
  %s3 = inlined_call_operand.vmem [shape: f32[1,128], index: 3, kind: input, shape index: {}]
  %s4 = inlined_call_operand.vmem [shape: f32[128,128], index: 4, kind: input, shape index: {}]
  %s5 = inlined_call_operand.vmem [shape: f32[1,128], index: 5, kind: input, shape index: {}]
  %s6 = inlined_call_operand.vmem [shape: f32[128,128], index: 6, kind: output, shape index: {}]
  %s7 = sld [smem:[#allocation0]]
  $region34: #{gcn_forward.1} parent=0
    _
  %s9 = ssub.s32 1, %s7
  %s10 = scalar_select 0, %s9, %s7
  // Predicated region
  $region2: #{gcn_forward.1} parent=0 // pred_check
    _
  $region3: #{gcn_forward.1} parent=0 // pred_check_branch
    %12 = sbr.rel (0) target = $region5
  $region4: #{gcn_forward.1} parent=0 // pred_region
    _
  $region5: #{gcn_forward.1} parent=0 // pred_fallthru
    _
  // Predicated region
  $region6: #{gcn_forward.1} parent=0 // pred_check
    _
  $region7: #{gcn_forward.1} parent=0 // pred_check_branch
    %14 = sbr.rel (0) target = $region9
  $region8: #{gcn_forward.1} parent=0 // pred_region
    _
  $region9: #{gcn_forward.1} parent=0 // pred_fallthru
    _
  // Predicated region
  $region10: #{gcn_forward.1} parent=0 // pred_check
    _
  $region11: #{gcn_forward.1} parent=0 // pred_check_branch
    %16 = sbr.rel (0) target = $region13
  $region12: #{gcn_forward.1} parent=0 // pred_region
    _
  $region13: #{gcn_forward.1} parent=0 // pred_fallthru
    _
  // Predicated region
  $region14: #{gcn_forward.1} parent=0 // pred_check
    _
  $region15: #{gcn_forward.1} parent=0 // pred_check_branch
    %18 = sbr.rel (0) target = $region17
  $region16: #{gcn_forward.1} parent=0 // pred_region
    _
  $region17: #{gcn_forward.1} parent=0 // pred_fallthru
    _
  // Predicated region
  $region18: #{gcn_forward.1} parent=0 // pred_check
    _
  $region19: #{gcn_forward.1} parent=0 // pred_check_branch
    %20 = sbr.rel (0) target = $region21
  $region20: #{gcn_forward.1} parent=0 // pred_region
    _
  $region21: #{gcn_forward.1} parent=0 // pred_fallthru
    _
  // Predicated region
  $region22: #{gcn_forward.1} parent=0 // pred_check
    _
  $region23: #{gcn_forward.1} parent=0 // pred_check_branch
    %22 = sbr.rel (0) target = $region25
  $region24: #{gcn_forward.1} parent=0 // pred_region
    _
  $region25: #{gcn_forward.1} parent=0 // pred_fallthru
    _
  %v23 = vld [vmem:[%s0] sm:$0xff]
  %v24 = vld [vmem:[%s0 + $0x8] sm:$0xff]
  %v25 = vld [vmem:[%s0 + $0x10] sm:$0xff]
  %v26 = vld [vmem:[%s0 + $0x18] sm:$0xff]
  %v27 = vld [vmem:[%s0 + $0x20] sm:$0xff]
  %v28 = vld [vmem:[%s0 + $0x28] sm:$0xff]
  %v29 = vld [vmem:[%s0 + $0x30] sm:$0xff]
  %v30 = vld [vmem:[%s0 + $0x38] sm:$0xff]
  %v31 = vld [vmem:[%s0 + $0x40] sm:$0xff]
  %v32 = vld [vmem:[%s0 + $0x48] sm:$0xff]
  %v33 = vld [vmem:[%s0 + $0x50] sm:$0xff]
  %v34 = vld [vmem:[%s0 + $0x58] sm:$0xff]
  %v35 = vld [vmem:[%s0 + $0x60] sm:$0xff]
  %v36 = vld [vmem:[%s0 + $0x68] sm:$0xff]
  %v37 = vld [vmem:[%s0 + $0x70] sm:$0xff]
  %v38 = vld [vmem:[%s0 + $0x78] sm:$0xff]
  %v39 = vld [vmem:[%s1] sm:$0xff]
  %v40 = vld [vmem:[%s1 + $0x8] sm:$0xff]
  %v41 = vld [vmem:[%s1 + $0x10] sm:$0xff]
  %v42 = vld [vmem:[%s1 + $0x18] sm:$0xff]
  %v43 = vld [vmem:[%s1 + $0x20] sm:$0xff]
  %v44 = vld [vmem:[%s1 + $0x28] sm:$0xff]
  %v45 = vld [vmem:[%s1 + $0x30] sm:$0xff]
  %v46 = vld [vmem:[%s1 + $0x38] sm:$0xff]
  %v47 = vld [vmem:[%s1 + $0x40] sm:$0xff]
  %v48 = vld [vmem:[%s1 + $0x48] sm:$0xff]
  %v49 = vld [vmem:[%s1 + $0x50] sm:$0xff]
  %v50 = vld [vmem:[%s1 + $0x58] sm:$0xff]
  %v51 = vld [vmem:[%s1 + $0x60] sm:$0xff]
  %v52 = vld [vmem:[%s1 + $0x68] sm:$0xff]
  %v53 = vld [vmem:[%s1 + $0x70] sm:$0xff]
  %v54 = vld [vmem:[%s1 + $0x78] sm:$0xff]
  %v55 = vld [vmem:[%s2] sm:$0xff]
  %v56 = vld [vmem:[%s2 + $0x8] sm:$0xff]
  %v57 = vld [vmem:[%s2 + $0x10] sm:$0xff]
  %v58 = vld [vmem:[%s2 + $0x18] sm:$0xff]
  %v59 = vld [vmem:[%s2 + $0x20] sm:$0xff]
  %v60 = vld [vmem:[%s2 + $0x28] sm:$0xff]
  %v61 = vld [vmem:[%s2 + $0x30] sm:$0xff]
  %v62 = vld [vmem:[%s2 + $0x38] sm:$0xff]
  %v63 = vld [vmem:[%s2 + $0x40] sm:$0xff]
  %v64 = vld [vmem:[%s2 + $0x48] sm:$0xff]
  %v65 = vld [vmem:[%s2 + $0x50] sm:$0xff]
  %v66 = vld [vmem:[%s2 + $0x58] sm:$0xff]
  %v67 = vld [vmem:[%s2 + $0x60] sm:$0xff]
  %v68 = vld [vmem:[%s2 + $0x68] sm:$0xff]
  %v69 = vld [vmem:[%s2 + $0x70] sm:$0xff]
  %v70 = vld [vmem:[%s2 + $0x78] sm:$0xff]
  %71 = vmatprep.subr.mxu0 0.0
  %72 = vmatpush1.msra.mxu0 %v55
  %73 = vmatprep.subr.mxu0 0.0
  %74 = vmatpush1.msra.mxu0 %v56
  %75 = vmatprep.subr.mxu0 0.0
  %76 = vmatpush1.msra.mxu0 %v57
  %77 = vmatprep.subr.mxu0 0.0
  %78 = vmatpush1.msra.mxu0 %v58
  %79 = vmatprep.subr.mxu0 0.0
  %80 = vmatpush1.msra.mxu0 %v59
  %81 = vmatprep.subr.mxu0 0.0
  %82 = vmatpush1.msra.mxu0 %v60
  %83 = vmatprep.subr.mxu0 0.0
  %84 = vmatpush1.msra.mxu0 %v61
  %85 = vmatprep.subr.mxu0 0.0
  %86 = vmatpush1.msra.mxu0 %v62
  %87 = vmatprep.subr.mxu0 0.0
  %88 = vmatpush1.msra.mxu0 %v63
  %89 = vmatprep.subr.mxu0 0.0
  %90 = vmatpush1.msra.mxu0 %v64
  %91 = vmatprep.subr.mxu0 0.0
  %92 = vmatpush1.msra.mxu0 %v65
  %93 = vmatprep.subr.mxu0 0.0
  %94 = vmatpush1.msra.mxu0 %v66
  %95 = vmatprep.subr.mxu0 0.0
  %96 = vmatpush1.msra.mxu0 %v67
  %97 = vmatprep.subr.mxu0 0.0
  %98 = vmatpush1.msra.mxu0 %v68
  %99 = vmatprep.subr.mxu0 0.0
  %100 = vmatpush1.msra.mxu0 %v69
  %101 = vmatprep.subr.mxu0 0.0
  %102 = vmatpush1.msra.mxu0 %v70
  %103 = vmatprep.subr.mxu0 0.0
  %104 = vmatpush1.msra.mxu0 0.0
  %105 = vmatprep.subr.mxu0 0.0
  %106 = vmatpush1.msra.mxu0 0.0
  %107 = vmatprep.subr.mxu0 0.0
  %108 = vmatpush1.msra.mxu0 0.0
  %109 = vmatprep.subr.mxu0 0.0
  %110 = vmatpush1.msra.mxu0 0.0
  %111 = vmatprep.subr.mxu0 0.0
  %112 = vmatpush1.msra.mxu0 0.0
  %113 = vmatprep.subr.mxu0 0.0
  %114 = vmatpush1.msra.mxu0 0.0
  %115 = vmatprep.subr.mxu0 0.0
  %116 = vmatpush1.msra.mxu0 0.0
  %117 = vmatprep.subr.mxu0 0.0
  %118 = vmatpush1.msra.mxu0 0.0
  %119 = vmatprep.subr.mxu0 0.0
  %120 = vmatpush1.msra.mxu0 0.0
  %121 = vmatprep.subr.mxu0 0.0
  %122 = vmatpush1.msra.mxu0 0.0
  %123 = vmatprep.subr.mxu0 0.0
  %124 = vmatpush1.msra.mxu0 0.0
  %125 = vmatprep.subr.mxu0 0.0
  %126 = vmatpush1.msra.mxu0 0.0
  %127 = vmatprep.subr.mxu0 0.0
  %128 = vmatpush1.msra.mxu0 0.0
  %129 = vmatprep.subr.mxu0 0.0
  %130 = vmatpush1.msra.mxu0 0.0
  %131 = vmatprep.subr.mxu0 0.0
  %132 = vmatpush1.msra.mxu0 0.0
  %133 = vmatprep.subr.mxu0 0.0
  %134 = vmatpush1.msra.mxu0 0.0
  %135 = vmatprep.mubr.f32.mxu0 0.0
  %136 = vmatmul.mubr.f32.gmra.mrb[0].mxu0 %v39
  %v137 = vpop.f32.mrb[0].mxu0
  %v138 = vadd.f32 0.0, %v137
  %v139 = vpop.f32.mrb[0].mxu0
  %140 = vmatprep.mubr.f32.mxu0 0.0
  %141 = vmatmul.mubr.f32.gmra.mrb[0].mxu0 %v40
  %v142 = vpop.f32.mrb[0].mxu0
  %v143 = vadd.f32 0.0, %v142
  %v144 = vpop.f32.mrb[0].mxu0
  %145 = vmatprep.mubr.f32.mxu0 0.0
  %146 = vmatmul.mubr.f32.gmra.mrb[0].mxu0 %v41
  %v147 = vpop.f32.mrb[0].mxu0
  %v148 = vadd.f32 0.0, %v147
  %v149 = vpop.f32.mrb[0].mxu0
  %150 = vmatprep.mubr.f32.mxu0 0.0
  %151 = vmatmul.mubr.f32.gmra.mrb[0].mxu0 %v42
  %v152 = vpop.f32.mrb[0].mxu0
  %v153 = vadd.f32 0.0, %v152
  %v154 = vpop.f32.mrb[0].mxu0
  %155 = vmatprep.mubr.f32.mxu0 0.0
  %156 = vmatmul.mubr.f32.gmra.mrb[0].mxu0 %v43
  %v157 = vpop.f32.mrb[0].mxu0
  %v158 = vadd.f32 0.0, %v157
  %v159 = vpop.f32.mrb[0].mxu0
  %160 = vmatprep.mubr.f32.mxu0 0.0
  %161 = vmatmul.mubr.f32.gmra.mrb[0].mxu0 %v44
  %v162 = vpop.f32.mrb[0].mxu0
  %v163 = vadd.f32 0.0, %v162
  %v164 = vpop.f32.mrb[0].mxu0
  %165 = vmatprep.mubr.f32.mxu0 0.0
  %166 = vmatmul.mubr.f32.gmra.mrb[0].mxu0 %v45
  %v167 = vpop.f32.mrb[0].mxu0
  %v168 = vadd.f32 0.0, %v167
  %v169 = vpop.f32.mrb[0].mxu0
  %170 = vmatprep.mubr.f32.mxu0 0.0
  %171 = vmatmul.mubr.f32.gmra.mrb[0].mxu0 %v46
  %v172 = vpop.f32.mrb[0].mxu0
  %v173 = vadd.f32 0.0, %v172
  %v174 = vpop.f32.mrb[0].mxu0
  %175 = vmatprep.mubr.f32.mxu0 0.0
  %176 = vmatmul.mubr.f32.gmra.mrb[0].mxu0 %v47
  %v177 = vpop.f32.mrb[0].mxu0
  %v178 = vadd.f32 0.0, %v177
  %v179 = vpop.f32.mrb[0].mxu0
  %180 = vmatprep.mubr.f32.mxu0 0.0
  %181 = vmatmul.mubr.f32.gmra.mrb[0].mxu0 %v48
  %v182 = vpop.f32.mrb[0].mxu0
  %v183 = vadd.f32 0.0, %v182
  %v184 = vpop.f32.mrb[0].mxu0
  %185 = vmatprep.mubr.f32.mxu0 0.0
  %186 = vmatmul.mubr.f32.gmra.mrb[0].mxu0 %v49
  %v187 = vpop.f32.mrb[0].mxu0
  %v188 = vadd.f32 0.0, %v187
  %v189 = vpop.f32.mrb[0].mxu0
  %190 = vmatprep.mubr.f32.mxu0 0.0
  %191 = vmatmul.mubr.f32.gmra.mrb[0].mxu0 %v50
  %v192 = vpop.f32.mrb[0].mxu0
  %v193 = vadd.f32 0.0, %v192
  %v194 = vpop.f32.mrb[0].mxu0
  %195 = vmatprep.mubr.f32.mxu0 0.0
  %196 = vmatmul.mubr.f32.gmra.mrb[0].mxu0 %v51
  %v197 = vpop.f32.mrb[0].mxu0
  %v198 = vadd.f32 0.0, %v197
  %v199 = vpop.f32.mrb[0].mxu0
  %200 = vmatprep.mubr.f32.mxu0 0.0
  %201 = vmatmul.mubr.f32.gmra.mrb[0].mxu0 %v52
  %v202 = vpop.f32.mrb[0].mxu0
  %v203 = vadd.f32 0.0, %v202
  %v204 = vpop.f32.mrb[0].mxu0
  %205 = vmatprep.mubr.f32.mxu0 0.0
  %206 = vmatmul.mubr.f32.gmra.mrb[0].mxu0 %v53
  %v207 = vpop.f32.mrb[0].mxu0
  %v208 = vadd.f32 0.0, %v207
  %v209 = vpop.f32.mrb[0].mxu0
  %210 = vmatprep.mubr.f32.mxu0 0.0
  %211 = vmatmul.mubr.f32.gmra.mrb[0].mxu0 %v54
  %v212 = vpop.f32.mrb[0].mxu0
  %v213 = vadd.f32 0.0, %v212
  %v214 = vpop.f32.mrb[0].mxu0
  %215 = vdwg.mxu0
  %v216 = vld [vmem:[%s3] sm:$0x1]
  %v218 = vlaneseq
  %v219 = vshrl.u32 %v218, 7
  %v220 = vsub.s32 0, %v219
  %v221 = vrot.slane %v216, %v220
  %223 = vmatprep.subr.mxu0 0.0
  %224 = vmatpush1.msra.mxu0 %v138
  %225 = vmatprep.subr.mxu0 0.0
  %226 = vmatpush1.msra.mxu0 %v143
  %227 = vmatprep.subr.mxu0 0.0
  %228 = vmatpush1.msra.mxu0 %v148
  %229 = vmatprep.subr.mxu0 0.0
  %230 = vmatpush1.msra.mxu0 %v153
  %231 = vmatprep.subr.mxu0 0.0
  %232 = vmatpush1.msra.mxu0 %v158
  %233 = vmatprep.subr.mxu0 0.0
  %234 = vmatpush1.msra.mxu0 %v163
  %235 = vmatprep.subr.mxu0 0.0
  %236 = vmatpush1.msra.mxu0 %v168
  %237 = vmatprep.subr.mxu0 0.0
  %238 = vmatpush1.msra.mxu0 %v173
  %239 = vmatprep.subr.mxu0 0.0
  %240 = vmatpush1.msra.mxu0 %v178
  %241 = vmatprep.subr.mxu0 0.0
  %242 = vmatpush1.msra.mxu0 %v183
  %243 = vmatprep.subr.mxu0 0.0
  %244 = vmatpush1.msra.mxu0 %v188
  %245 = vmatprep.subr.mxu0 0.0
  %246 = vmatpush1.msra.mxu0 %v193
  %247 = vmatprep.subr.mxu0 0.0
  %248 = vmatpush1.msra.mxu0 %v198
  %249 = vmatprep.subr.mxu0 0.0
  %250 = vmatpush1.msra.mxu0 %v203
  %251 = vmatprep.subr.mxu0 0.0
  %252 = vmatpush1.msra.mxu0 %v208
  %253 = vmatprep.subr.mxu0 0.0
  %254 = vmatpush1.msra.mxu0 %v213
  %255 = vmatprep.subr.mxu0 0.0
  %256 = vmatpush1.msra.mxu0 0.0
  %257 = vmatprep.subr.mxu0 0.0
  %258 = vmatpush1.msra.mxu0 0.0
  %259 = vmatprep.subr.mxu0 0.0
  %260 = vmatpush1.msra.mxu0 0.0
  %261 = vmatprep.subr.mxu0 0.0
  %262 = vmatpush1.msra.mxu0 0.0
  %263 = vmatprep.subr.mxu0 0.0
  %264 = vmatpush1.msra.mxu0 0.0
  %265 = vmatprep.subr.mxu0 0.0
  %266 = vmatpush1.msra.mxu0 0.0
  %267 = vmatprep.subr.mxu0 0.0
  %268 = vmatpush1.msra.mxu0 0.0
  %269 = vmatprep.subr.mxu0 0.0
  %270 = vmatpush1.msra.mxu0 0.0
  %271 = vmatprep.subr.mxu0 0.0
  %272 = vmatpush1.msra.mxu0 0.0
  %273 = vmatprep.subr.mxu0 0.0
  %274 = vmatpush1.msra.mxu0 0.0
  %275 = vmatprep.subr.mxu0 0.0
  %276 = vmatpush1.msra.mxu0 0.0
  %277 = vmatprep.subr.mxu0 0.0
  %278 = vmatpush1.msra.mxu0 0.0
  %279 = vmatprep.subr.mxu0 0.0
  %280 = vmatpush1.msra.mxu0 0.0
  %281 = vmatprep.subr.mxu0 0.0
  %282 = vmatpush1.msra.mxu0 0.0
  %283 = vmatprep.subr.mxu0 0.0
  %284 = vmatpush1.msra.mxu0 0.0
  %285 = vmatprep.subr.mxu0 0.0
  %286 = vmatpush1.msra.mxu0 0.0
  %287 = vmatprep.mubr.f32.mxu0 0.0
  %288 = vmatmul.mubr.f32.gmra.mrb[0].mxu0 %v23
  %v289 = vpop.f32.mrb[0].mxu0
  %v290 = vadd.f32 %v221, %v289
  %v291 = vpop.f32.mrb[0].mxu0
  %292 = vmatprep.mubr.f32.mxu0 0.0
  %293 = vmatmul.mubr.f32.gmra.mrb[0].mxu0 %v24
  %v294 = vpop.f32.mrb[0].mxu0
  %v295 = vadd.f32 %v221, %v294
  %v296 = vpop.f32.mrb[0].mxu0
  %297 = vmatprep.mubr.f32.mxu0 0.0
  %298 = vmatmul.mubr.f32.gmra.mrb[0].mxu0 %v25
  %v299 = vpop.f32.mrb[0].mxu0
  %v300 = vadd.f32 %v221, %v299
  %v301 = vpop.f32.mrb[0].mxu0
  %302 = vmatprep.mubr.f32.mxu0 0.0
  %303 = vmatmul.mubr.f32.gmra.mrb[0].mxu0 %v26
  %v304 = vpop.f32.mrb[0].mxu0
  %v305 = vadd.f32 %v221, %v304
  %v306 = vpop.f32.mrb[0].mxu0
  %307 = vmatprep.mubr.f32.mxu0 0.0
  %308 = vmatmul.mubr.f32.gmra.mrb[0].mxu0 %v27
  %v309 = vpop.f32.mrb[0].mxu0
  %v310 = vadd.f32 %v221, %v309
  %v311 = vpop.f32.mrb[0].mxu0
  %312 = vmatprep.mubr.f32.mxu0 0.0
  %313 = vmatmul.mubr.f32.gmra.mrb[0].mxu0 %v28
  %v314 = vpop.f32.mrb[0].mxu0
  %v315 = vadd.f32 %v221, %v314
  %v316 = vpop.f32.mrb[0].mxu0
  %317 = vmatprep.mubr.f32.mxu0 0.0
  %318 = vmatmul.mubr.f32.gmra.mrb[0].mxu0 %v29
  %v319 = vpop.f32.mrb[0].mxu0
  %v320 = vadd.f32 %v221, %v319
  %v321 = vpop.f32.mrb[0].mxu0
  %322 = vmatprep.mubr.f32.mxu0 0.0
  %323 = vmatmul.mubr.f32.gmra.mrb[0].mxu0 %v30
  %v324 = vpop.f32.mrb[0].mxu0
  %v325 = vadd.f32 %v221, %v324
  %v326 = vpop.f32.mrb[0].mxu0
  %327 = vmatprep.mubr.f32.mxu0 0.0
  %328 = vmatmul.mubr.f32.gmra.mrb[0].mxu0 %v31
  %v329 = vpop.f32.mrb[0].mxu0
  %v330 = vadd.f32 %v221, %v329
  %v331 = vpop.f32.mrb[0].mxu0
  %332 = vmatprep.mubr.f32.mxu0 0.0
  %333 = vmatmul.mubr.f32.gmra.mrb[0].mxu0 %v32
  %v334 = vpop.f32.mrb[0].mxu0
  %v335 = vadd.f32 %v221, %v334
  %v336 = vpop.f32.mrb[0].mxu0
  %337 = vmatprep.mubr.f32.mxu0 0.0
  %338 = vmatmul.mubr.f32.gmra.mrb[0].mxu0 %v33
  %v339 = vpop.f32.mrb[0].mxu0
  %v340 = vadd.f32 %v221, %v339
  %v341 = vpop.f32.mrb[0].mxu0
  %342 = vmatprep.mubr.f32.mxu0 0.0
  %343 = vmatmul.mubr.f32.gmra.mrb[0].mxu0 %v34
  %v344 = vpop.f32.mrb[0].mxu0
  %v345 = vadd.f32 %v221, %v344
  %v346 = vpop.f32.mrb[0].mxu0
  %347 = vmatprep.mubr.f32.mxu0 0.0
  %348 = vmatmul.mubr.f32.gmra.mrb[0].mxu0 %v35
  %v349 = vpop.f32.mrb[0].mxu0
  %v350 = vadd.f32 %v221, %v349
  %v351 = vpop.f32.mrb[0].mxu0
  %352 = vmatprep.mubr.f32.mxu0 0.0
  %353 = vmatmul.mubr.f32.gmra.mrb[0].mxu0 %v36
  %v354 = vpop.f32.mrb[0].mxu0
  %v355 = vadd.f32 %v221, %v354
  %v356 = vpop.f32.mrb[0].mxu0
  %357 = vmatprep.mubr.f32.mxu0 0.0
  %358 = vmatmul.mubr.f32.gmra.mrb[0].mxu0 %v37
  %v359 = vpop.f32.mrb[0].mxu0
  %v360 = vadd.f32 %v221, %v359
  %v361 = vpop.f32.mrb[0].mxu0
  %362 = vmatprep.mubr.f32.mxu0 0.0
  %363 = vmatmul.mubr.f32.gmra.mrb[0].mxu0 %v38
  %v364 = vpop.f32.mrb[0].mxu0
  %v365 = vadd.f32 %v221, %v364
  %v366 = vpop.f32.mrb[0].mxu0
  %367 = vdwg.mxu0
  %v368 = vmax.f32 %v290, 0.0
  %v369 = vmax.f32 %v295, 0.0
  %v370 = vmax.f32 %v300, 0.0
  %v371 = vmax.f32 %v305, 0.0
  %v372 = vmax.f32 %v310, 0.0
  %v373 = vmax.f32 %v315, 0.0
  %v374 = vmax.f32 %v320, 0.0
  %v375 = vmax.f32 %v325, 0.0
  %v376 = vmax.f32 %v330, 0.0
  %v377 = vmax.f32 %v335, 0.0
  %v378 = vmax.f32 %v340, 0.0
  %v379 = vmax.f32 %v345, 0.0
  %v380 = vmax.f32 %v350, 0.0
  %v381 = vmax.f32 %v355, 0.0
  %v382 = vmax.f32 %v360, 0.0
  %v383 = vmax.f32 %v365, 0.0
  %v384 = vld [vmem:[%s4] sm:$0xff]
  %v385 = vld [vmem:[%s4 + $0x8] sm:$0xff]
  %v386 = vld [vmem:[%s4 + $0x10] sm:$0xff]
  %v387 = vld [vmem:[%s4 + $0x18] sm:$0xff]
  %v388 = vld [vmem:[%s4 + $0x20] sm:$0xff]
  %v389 = vld [vmem:[%s4 + $0x28] sm:$0xff]
  %v390 = vld [vmem:[%s4 + $0x30] sm:$0xff]
  %v391 = vld [vmem:[%s4 + $0x38] sm:$0xff]
  %v392 = vld [vmem:[%s4 + $0x40] sm:$0xff]
  %v393 = vld [vmem:[%s4 + $0x48] sm:$0xff]
  %v394 = vld [vmem:[%s4 + $0x50] sm:$0xff]
  %v395 = vld [vmem:[%s4 + $0x58] sm:$0xff]
  %v396 = vld [vmem:[%s4 + $0x60] sm:$0xff]
  %v397 = vld [vmem:[%s4 + $0x68] sm:$0xff]
  %v398 = vld [vmem:[%s4 + $0x70] sm:$0xff]
  %v399 = vld [vmem:[%s4 + $0x78] sm:$0xff]
  %400 = vmatprep.subr.mxu0 0.0
  %401 = vmatpush1.msra.mxu0 %v384
  %402 = vmatprep.subr.mxu0 0.0
  %403 = vmatpush1.msra.mxu0 %v385
  %404 = vmatprep.subr.mxu0 0.0
  %405 = vmatpush1.msra.mxu0 %v386
  %406 = vmatprep.subr.mxu0 0.0
  %407 = vmatpush1.msra.mxu0 %v387
  %408 = vmatprep.subr.mxu0 0.0
  %409 = vmatpush1.msra.mxu0 %v388
  %410 = vmatprep.subr.mxu0 0.0
  %411 = vmatpush1.msra.mxu0 %v389
  %412 = vmatprep.subr.mxu0 0.0
  %413 = vmatpush1.msra.mxu0 %v390
  %414 = vmatprep.subr.mxu0 0.0
  %415 = vmatpush1.msra.mxu0 %v391
  %416 = vmatprep.subr.mxu0 0.0
  %417 = vmatpush1.msra.mxu0 %v392
  %418 = vmatprep.subr.mxu0 0.0
  %419 = vmatpush1.msra.mxu0 %v393
  %420 = vmatprep.subr.mxu0 0.0
  %421 = vmatpush1.msra.mxu0 %v394
  %422 = vmatprep.subr.mxu0 0.0
  %423 = vmatpush1.msra.mxu0 %v395
  %424 = vmatprep.subr.mxu0 0.0
  %425 = vmatpush1.msra.mxu0 %v396
  %426 = vmatprep.subr.mxu0 0.0
  %427 = vmatpush1.msra.mxu0 %v397
  %428 = vmatprep.subr.mxu0 0.0
  %429 = vmatpush1.msra.mxu0 %v398
  %430 = vmatprep.subr.mxu0 0.0
  %431 = vmatpush1.msra.mxu0 %v399
  %432 = vmatprep.subr.mxu0 0.0
  %433 = vmatpush1.msra.mxu0 0.0
  %434 = vmatprep.subr.mxu0 0.0
  %435 = vmatpush1.msra.mxu0 0.0
  %436 = vmatprep.subr.mxu0 0.0
  %437 = vmatpush1.msra.mxu0 0.0
  %438 = vmatprep.subr.mxu0 0.0
  %439 = vmatpush1.msra.mxu0 0.0
  %440 = vmatprep.subr.mxu0 0.0
  %441 = vmatpush1.msra.mxu0 0.0
  %442 = vmatprep.subr.mxu0 0.0
  %443 = vmatpush1.msra.mxu0 0.0
  %444 = vmatprep.subr.mxu0 0.0
  %445 = vmatpush1.msra.mxu0 0.0
  %446 = vmatprep.subr.mxu0 0.0
  %447 = vmatpush1.msra.mxu0 0.0
  %448 = vmatprep.subr.mxu0 0.0
  %449 = vmatpush1.msra.mxu0 0.0
  %450 = vmatprep.subr.mxu0 0.0
  %451 = vmatpush1.msra.mxu0 0.0
  %452 = vmatprep.subr.mxu0 0.0
  %453 = vmatpush1.msra.mxu0 0.0
  %454 = vmatprep.subr.mxu0 0.0
  %455 = vmatpush1.msra.mxu0 0.0
  %456 = vmatprep.subr.mxu0 0.0
  %457 = vmatpush1.msra.mxu0 0.0
  %458 = vmatprep.subr.mxu0 0.0
  %459 = vmatpush1.msra.mxu0 0.0
  %460 = vmatprep.subr.mxu0 0.0
  %461 = vmatpush1.msra.mxu0 0.0
  %462 = vmatprep.subr.mxu0 0.0
  %463 = vmatpush1.msra.mxu0 0.0
  %464 = vmatprep.mubr.f32.mxu0 0.0
  %465 = vmatmul.mubr.f32.gmra.mrb[0].mxu0 %v368
  %v466 = vpop.f32.mrb[0].mxu0
  %v467 = vadd.f32 0.0, %v466
  %v468 = vpop.f32.mrb[0].mxu0
  %469 = vmatprep.mubr.f32.mxu0 0.0
  %470 = vmatmul.mubr.f32.gmra.mrb[0].mxu0 %v369
  %v471 = vpop.f32.mrb[0].mxu0
  %v472 = vadd.f32 0.0, %v471
  %v473 = vpop.f32.mrb[0].mxu0
  %474 = vmatprep.mubr.f32.mxu0 0.0
  %475 = vmatmul.mubr.f32.gmra.mrb[0].mxu0 %v370
  %v476 = vpop.f32.mrb[0].mxu0
  %v477 = vadd.f32 0.0, %v476
  %v478 = vpop.f32.mrb[0].mxu0
  %479 = vmatprep.mubr.f32.mxu0 0.0
  %480 = vmatmul.mubr.f32.gmra.mrb[0].mxu0 %v371
  %v481 = vpop.f32.mrb[0].mxu0
  %v482 = vadd.f32 0.0, %v481
  %v483 = vpop.f32.mrb[0].mxu0
  %484 = vmatprep.mubr.f32.mxu0 0.0
  %485 = vmatmul.mubr.f32.gmra.mrb[0].mxu0 %v372
  %v486 = vpop.f32.mrb[0].mxu0
  %v487 = vadd.f32 0.0, %v486
  %v488 = vpop.f32.mrb[0].mxu0
  %489 = vmatprep.mubr.f32.mxu0 0.0
  %490 = vmatmul.mubr.f32.gmra.mrb[0].mxu0 %v373
  %v491 = vpop.f32.mrb[0].mxu0
  %v492 = vadd.f32 0.0, %v491
  %v493 = vpop.f32.mrb[0].mxu0
  %494 = vmatprep.mubr.f32.mxu0 0.0
  %495 = vmatmul.mubr.f32.gmra.mrb[0].mxu0 %v374
  %v496 = vpop.f32.mrb[0].mxu0
  %v497 = vadd.f32 0.0, %v496
  %v498 = vpop.f32.mrb[0].mxu0
  %499 = vmatprep.mubr.f32.mxu0 0.0
  %500 = vmatmul.mubr.f32.gmra.mrb[0].mxu0 %v375
  %v501 = vpop.f32.mrb[0].mxu0
  %v502 = vadd.f32 0.0, %v501
  %v503 = vpop.f32.mrb[0].mxu0
  %504 = vmatprep.mubr.f32.mxu0 0.0
  %505 = vmatmul.mubr.f32.gmra.mrb[0].mxu0 %v376
  %v506 = vpop.f32.mrb[0].mxu0
  %v507 = vadd.f32 0.0, %v506
  %v508 = vpop.f32.mrb[0].mxu0
  %509 = vmatprep.mubr.f32.mxu0 0.0
  %510 = vmatmul.mubr.f32.gmra.mrb[0].mxu0 %v377
  %v511 = vpop.f32.mrb[0].mxu0
  %v512 = vadd.f32 0.0, %v511
  %v513 = vpop.f32.mrb[0].mxu0
  %514 = vmatprep.mubr.f32.mxu0 0.0
  %515 = vmatmul.mubr.f32.gmra.mrb[0].mxu0 %v378
  %v516 = vpop.f32.mrb[0].mxu0
  %v517 = vadd.f32 0.0, %v516
  %v518 = vpop.f32.mrb[0].mxu0
  %519 = vmatprep.mubr.f32.mxu0 0.0
  %520 = vmatmul.mubr.f32.gmra.mrb[0].mxu0 %v379
  %v521 = vpop.f32.mrb[0].mxu0
  %v522 = vadd.f32 0.0, %v521
  %v523 = vpop.f32.mrb[0].mxu0
  %524 = vmatprep.mubr.f32.mxu0 0.0
  %525 = vmatmul.mubr.f32.gmra.mrb[0].mxu0 %v380
  %v526 = vpop.f32.mrb[0].mxu0
  %v527 = vadd.f32 0.0, %v526
  %v528 = vpop.f32.mrb[0].mxu0
  %529 = vmatprep.mubr.f32.mxu0 0.0
  %530 = vmatmul.mubr.f32.gmra.mrb[0].mxu0 %v381
  %v531 = vpop.f32.mrb[0].mxu0
  %v532 = vadd.f32 0.0, %v531
  %v533 = vpop.f32.mrb[0].mxu0
  %534 = vmatprep.mubr.f32.mxu0 0.0
  %535 = vmatmul.mubr.f32.gmra.mrb[0].mxu0 %v382
  %v536 = vpop.f32.mrb[0].mxu0
  %v537 = vadd.f32 0.0, %v536
  %v538 = vpop.f32.mrb[0].mxu0
  %539 = vmatprep.mubr.f32.mxu0 0.0
  %540 = vmatmul.mubr.f32.gmra.mrb[0].mxu0 %v383
  %v541 = vpop.f32.mrb[0].mxu0
  %v542 = vadd.f32 0.0, %v541
  %v543 = vpop.f32.mrb[0].mxu0
  %544 = vdwg.mxu0
  %v545 = vld [vmem:[%s5] sm:$0x1]
  %v547 = vlaneseq
  %v548 = vshrl.u32 %v547, 7
  %v549 = vsub.s32 0, %v548
  %v550 = vrot.slane %v545, %v549
  %552 = vmatprep.subr.mxu0 0.0
  %553 = vmatpush1.msra.mxu0 %v467
  %554 = vmatprep.subr.mxu0 0.0
  %555 = vmatpush1.msra.mxu0 %v472
  %556 = vmatprep.subr.mxu0 0.0
  %557 = vmatpush1.msra.mxu0 %v477
  %558 = vmatprep.subr.mxu0 0.0
  %559 = vmatpush1.msra.mxu0 %v482
  %560 = vmatprep.subr.mxu0 0.0
  %561 = vmatpush1.msra.mxu0 %v487
  %562 = vmatprep.subr.mxu0 0.0
  %563 = vmatpush1.msra.mxu0 %v492
  %564 = vmatprep.subr.mxu0 0.0
  %565 = vmatpush1.msra.mxu0 %v497
  %566 = vmatprep.subr.mxu0 0.0
  %567 = vmatpush1.msra.mxu0 %v502
  %568 = vmatprep.subr.mxu0 0.0
  %569 = vmatpush1.msra.mxu0 %v507
  %570 = vmatprep.subr.mxu0 0.0
  %571 = vmatpush1.msra.mxu0 %v512
  %572 = vmatprep.subr.mxu0 0.0
  %573 = vmatpush1.msra.mxu0 %v517
  %574 = vmatprep.subr.mxu0 0.0
  %575 = vmatpush1.msra.mxu0 %v522
  %576 = vmatprep.subr.mxu0 0.0
  %577 = vmatpush1.msra.mxu0 %v527
  %578 = vmatprep.subr.mxu0 0.0
  %579 = vmatpush1.msra.mxu0 %v532
  %580 = vmatprep.subr.mxu0 0.0
  %581 = vmatpush1.msra.mxu0 %v537
  %582 = vmatprep.subr.mxu0 0.0
  %583 = vmatpush1.msra.mxu0 %v542
  %584 = vmatprep.subr.mxu0 0.0
  %585 = vmatpush1.msra.mxu0 0.0
  %586 = vmatprep.subr.mxu0 0.0
  %587 = vmatpush1.msra.mxu0 0.0
  %588 = vmatprep.subr.mxu0 0.0
  %589 = vmatpush1.msra.mxu0 0.0
  %590 = vmatprep.subr.mxu0 0.0
  %591 = vmatpush1.msra.mxu0 0.0
  %592 = vmatprep.subr.mxu0 0.0
  %593 = vmatpush1.msra.mxu0 0.0
  %594 = vmatprep.subr.mxu0 0.0
  %595 = vmatpush1.msra.mxu0 0.0
  %596 = vmatprep.subr.mxu0 0.0
  %597 = vmatpush1.msra.mxu0 0.0
  %598 = vmatprep.subr.mxu0 0.0
  %599 = vmatpush1.msra.mxu0 0.0
  %600 = vmatprep.subr.mxu0 0.0
  %601 = vmatpush1.msra.mxu0 0.0
  %602 = vmatprep.subr.mxu0 0.0
  %603 = vmatpush1.msra.mxu0 0.0
  %604 = vmatprep.subr.mxu0 0.0
  %605 = vmatpush1.msra.mxu0 0.0
  %606 = vmatprep.subr.mxu0 0.0
  %607 = vmatpush1.msra.mxu0 0.0
  %608 = vmatprep.subr.mxu0 0.0
  %609 = vmatpush1.msra.mxu0 0.0
  %610 = vmatprep.subr.mxu0 0.0
  %611 = vmatpush1.msra.mxu0 0.0
  %612 = vmatprep.subr.mxu0 0.0
  %613 = vmatpush1.msra.mxu0 0.0
  %614 = vmatprep.subr.mxu0 0.0
  %615 = vmatpush1.msra.mxu0 0.0
  %616 = vmatprep.mubr.f32.mxu0 0.0
  %617 = vmatmul.mubr.f32.gmra.mrb[0].mxu0 %v23
  %v618 = vpop.f32.mrb[0].mxu0
  %v619 = vadd.f32 %v550, %v618
  %v620 = vpop.f32.mrb[0].mxu0
  %621 = vmatprep.mubr.f32.mxu0 0.0
  %622 = vmatmul.mubr.f32.gmra.mrb[0].mxu0 %v24
  %v623 = vpop.f32.mrb[0].mxu0
  %v624 = vadd.f32 %v550, %v623
  %v625 = vpop.f32.mrb[0].mxu0
  %626 = vmatprep.mubr.f32.mxu0 0.0
  %627 = vmatmul.mubr.f32.gmra.mrb[0].mxu0 %v25
  %v628 = vpop.f32.mrb[0].mxu0
  %v629 = vadd.f32 %v550, %v628
  %v630 = vpop.f32.mrb[0].mxu0
  %631 = vmatprep.mubr.f32.mxu0 0.0
  %632 = vmatmul.mubr.f32.gmra.mrb[0].mxu0 %v26
  %v633 = vpop.f32.mrb[0].mxu0
  %v634 = vadd.f32 %v550, %v633
  %v635 = vpop.f32.mrb[0].mxu0
  %636 = vmatprep.mubr.f32.mxu0 0.0
  %637 = vmatmul.mubr.f32.gmra.mrb[0].mxu0 %v27
  %v638 = vpop.f32.mrb[0].mxu0
  %v639 = vadd.f32 %v550, %v638
  %v640 = vpop.f32.mrb[0].mxu0
  %641 = vmatprep.mubr.f32.mxu0 0.0
  %642 = vmatmul.mubr.f32.gmra.mrb[0].mxu0 %v28
  %v643 = vpop.f32.mrb[0].mxu0
  %v644 = vadd.f32 %v550, %v643
  %v645 = vpop.f32.mrb[0].mxu0
  %646 = vmatprep.mubr.f32.mxu0 0.0
  %647 = vmatmul.mubr.f32.gmra.mrb[0].mxu0 %v29
  %v648 = vpop.f32.mrb[0].mxu0
  %v649 = vadd.f32 %v550, %v648
  %v650 = vpop.f32.mrb[0].mxu0
  %651 = vmatprep.mubr.f32.mxu0 0.0
  %652 = vmatmul.mubr.f32.gmra.mrb[0].mxu0 %v30
  %v653 = vpop.f32.mrb[0].mxu0
  %v654 = vadd.f32 %v550, %v653
  %v655 = vpop.f32.mrb[0].mxu0
  %656 = vmatprep.mubr.f32.mxu0 0.0
  %657 = vmatmul.mubr.f32.gmra.mrb[0].mxu0 %v31
  %v658 = vpop.f32.mrb[0].mxu0
  %v659 = vadd.f32 %v550, %v658
  %v660 = vpop.f32.mrb[0].mxu0
  %661 = vmatprep.mubr.f32.mxu0 0.0
  %662 = vmatmul.mubr.f32.gmra.mrb[0].mxu0 %v32
  %v663 = vpop.f32.mrb[0].mxu0
  %v664 = vadd.f32 %v550, %v663
  %v665 = vpop.f32.mrb[0].mxu0
  %666 = vmatprep.mubr.f32.mxu0 0.0
  %667 = vmatmul.mubr.f32.gmra.mrb[0].mxu0 %v33
  %v668 = vpop.f32.mrb[0].mxu0
  %v669 = vadd.f32 %v550, %v668
  %v670 = vpop.f32.mrb[0].mxu0
  %671 = vmatprep.mubr.f32.mxu0 0.0
  %672 = vmatmul.mubr.f32.gmra.mrb[0].mxu0 %v34
  %v673 = vpop.f32.mrb[0].mxu0
  %v674 = vadd.f32 %v550, %v673
  %v675 = vpop.f32.mrb[0].mxu0
  %676 = vmatprep.mubr.f32.mxu0 0.0
  %677 = vmatmul.mubr.f32.gmra.mrb[0].mxu0 %v35
  %v678 = vpop.f32.mrb[0].mxu0
  %v679 = vadd.f32 %v550, %v678
  %v680 = vpop.f32.mrb[0].mxu0
  %681 = vmatprep.mubr.f32.mxu0 0.0
  %682 = vmatmul.mubr.f32.gmra.mrb[0].mxu0 %v36
  %v683 = vpop.f32.mrb[0].mxu0
  %v684 = vadd.f32 %v550, %v683
  %v685 = vpop.f32.mrb[0].mxu0
  %686 = vmatprep.mubr.f32.mxu0 0.0
  %687 = vmatmul.mubr.f32.gmra.mrb[0].mxu0 %v37
  %v688 = vpop.f32.mrb[0].mxu0
  %v689 = vadd.f32 %v550, %v688
  %v690 = vpop.f32.mrb[0].mxu0
  %691 = vmatprep.mubr.f32.mxu0 0.0
  %692 = vmatmul.mubr.f32.gmra.mrb[0].mxu0 %v38
  %v693 = vpop.f32.mrb[0].mxu0
  %v694 = vadd.f32 %v550, %v693
  %v695 = vpop.f32.mrb[0].mxu0
  %696 = vdwg.mxu0
  %697 = vst [vmem:[%s6] sm:$0xff] %v619
  %698 = vst [vmem:[%s6 + $0x8] sm:$0xff] %v624
  %699 = vst [vmem:[%s6 + $0x10] sm:$0xff] %v629
  %700 = vst [vmem:[%s6 + $0x18] sm:$0xff] %v634
  %701 = vst [vmem:[%s6 + $0x20] sm:$0xff] %v639
  %702 = vst [vmem:[%s6 + $0x28] sm:$0xff] %v644
  %703 = vst [vmem:[%s6 + $0x30] sm:$0xff] %v649
  %704 = vst [vmem:[%s6 + $0x38] sm:$0xff] %v654
  %705 = vst [vmem:[%s6 + $0x40] sm:$0xff] %v659
  %706 = vst [vmem:[%s6 + $0x48] sm:$0xff] %v664
  %707 = vst [vmem:[%s6 + $0x50] sm:$0xff] %v669
  %708 = vst [vmem:[%s6 + $0x58] sm:$0xff] %v674
  %709 = vst [vmem:[%s6 + $0x60] sm:$0xff] %v679
  %710 = vst [vmem:[%s6 + $0x68] sm:$0xff] %v684
  %711 = vst [vmem:[%s6 + $0x70] sm:$0xff] %v689
  %712 = vst [vmem:[%s6 + $0x78] sm:$0xff] %v694
  // Predicated region
  $region26: #{gcn_forward.1} parent=0 // pred_check
    _
  $region27: #{gcn_forward.1} parent=0 // pred_check_branch
    %714 = sbr.rel (0) target = $region29
  $region28: #{gcn_forward.1} parent=0 // pred_region
    _
  $region29: #{gcn_forward.1} parent=0 // pred_fallthru
    _
  // Predicated region
  $region30: #{gcn_forward.1} parent=0 // pred_check
    _
  $region31: #{gcn_forward.1} parent=0 // pred_check_branch
    %716 = sbr.rel (0) target = $region33
  $region32: #{gcn_forward.1} parent=0 // pred_region
    _
  $region33: #{gcn_forward.1} parent=0 // pred_fallthru
    _

</llo_original>
